<compile_context>
chip_gen: v7x
topology: tpu7x:2x2x1
jax: 0.10.0
libtpu: 0.0.40
codegen_flags: <defaults>
</compile_context>

<pallas_src>
import functools
import math

import jax
import jax.numpy as jnp
from jax import lax
from jax.experimental import pallas as pl
from jax.experimental.pallas import tpu as pltpu

_NEG_INF = -1e30          # finite mask value: exp underflows to 0, no NaN hazard
_VMEM_LIMIT = 64 * 1024 * 1024


def _sublane_align(dtype):
    """Sublane packing alignment: 8 for 4-byte, 16 for 2-byte, 32 for 1-byte."""
    return {4: 8, 2: 16, 1: 32}.get(jnp.dtype(dtype).itemsize, 8)


def _pick_tile(dim, cap, align):
    """Largest tile <= cap that divides `dim` and is a multiple of `align`.
    Small dims (<= cap) use the full dimension (full-extent blocks are always
    legal). Oversized dims with no aligned divisor raise instead of silently
    emitting a whole-dimension block that could blow the VMEM budget."""
    if dim <= cap:
        return dim
    t = (cap // align) * align
    while t >= align:
        if dim % t == 0:
            return t
        t -= align
    raise ValueError(
        f"_pick_tile: dim={dim} has no {align}-aligned divisor <= {cap}; "
        "pad the array to a tile multiple before calling the kernel."
    )


# ----------------------------------------------------------------------------
# Kernel 1: tiled dense projection  y = x @ W + b   (c_attn and c_proj)
# ----------------------------------------------------------------------------
def _linear_kernel(x_ref, w_ref, b_ref, o_ref, acc_ref):
    k = pl.program_id(2)

    @pl.when(k == 0)
    def _init():
        acc_ref[...] = jnp.zeros(acc_ref.shape, acc_ref.dtype)

    acc_ref[...] += jnp.dot(
        x_ref[...], w_ref[...], preferred_element_type=jnp.float32
    )

    @pl.when(k == pl.num_programs(2) - 1)
    def _finalize():
        # bias add fused into the epilogue (VPU work under the MXU shadow)
        o_ref[...] = (acc_ref[...] + b_ref[...].astype(jnp.float32)).astype(o_ref.dtype)


def linear(x2d, w, b, *, tm_cap=512, tn_cap=512, tk_cap=512):
    """x2d: (M, K), w: (K, N), b: (N,) -> (M, N), tiled + pipelined."""
    M, K = x2d.shape
    N = w.shape[1]
    b2d = b.reshape(1, N)

    tm = _pick_tile(M, tm_cap, _sublane_align(x2d.dtype))  # sublane-aligned
    tn = _pick_tile(N, tn_cap, 128)                         # lane-aligned
    tk = _pick_tile(K, tk_cap, 128)                         # lane-aligned

    grid = (M // tm, N // tn, K // tk)  # reduction axis last

    return pl.pallas_call(
        _linear_kernel,
        out_shape=jax.ShapeDtypeStruct((M, N), x2d.dtype),
        grid_spec=pltpu.PrefetchScalarGridSpec(
            num_scalar_prefetch=0,
            grid=grid,
            in_specs=[
                pl.BlockSpec((tm, tk), lambda i, j, k: (i, k)),
                pl.BlockSpec((tk, tn), lambda i, j, k: (k, j)),
                pl.BlockSpec((1, tn), lambda i, j, k: (0, j)),
            ],
            out_specs=pl.BlockSpec((tm, tn), lambda i, j, k: (i, j)),
            scratch_shapes=[pltpu.VMEM((tm, tn), jnp.float32)],
        ),
        compiler_params=pltpu.CompilerParams(
            dimension_semantics=("parallel", "parallel", "arbitrary"),
            vmem_limit_bytes=_VMEM_LIMIT,
        ),
    )(x2d, w, b2d)


# ----------------------------------------------------------------------------
# Kernel 2: head-fused causal flash attention, grid = (B, q_tiles, kv_tiles)
#   q/k/v/o blocks are lane-dense (1, tile, C) slabs; heads are split inside
#   the kernel with static lane slices.
# ----------------------------------------------------------------------------
def _flash_attn_kernel(q_ref, k_ref, v_ref, o_ref,
                       qs_ref, m_ref, l_ref, acc_ref, *, n_head):
    qi = pl.program_id(1)
    ki = pl.program_id(2)
    nk = pl.num_programs(2)

    tq = q_ref.shape[1]
    tkv = k_ref.shape[1]
    c = q_ref.shape[2]
    d = c // n_head
    scale = 1.0 / math.sqrt(d)

    @pl.when(ki == 0)
    def _init():
        # 1/sqrt(D) folded into q ONCE per q tile (q block is resident across kv)
        qs_ref[...] = q_ref[0] * scale
        m_ref[...] = jnp.full(m_ref.shape, _NEG_INF, m_ref.dtype)
        l_ref[...] = jnp.zeros(l_ref.shape, l_ref.dtype)
        acc_ref[...] = jnp.zeros(acc_ref.shape, acc_ref.dtype)

    q_first = qi * tq
    q_last = q_first + tq - 1
    kv_first = ki * tkv
    kv_last = kv_first + tkv - 1

    def _process(apply_mask):
        if apply_mask:
            row = q_first + lax.broadcasted_iota(jnp.int32, (tq, tkv), 0)
            col = kv_first + lax.broadcasted_iota(jnp.int32, (tq, tkv), 1)
            visible = col <= row
        for h in range(n_head):
            hs = slice(h * d, (h + 1) * d)
            q_h = qs_ref[:, hs]                       # (tq, d), pre-scaled
            k_h = k_ref[0, :, hs]                     # (tkv, d)
            v_h = v_ref[0, :, hs]                     # (tkv, d)

            # Contract the D axis directly: no K-tile transpose/relayout.
            s = lax.dot_general(
                q_h, k_h,
                dimension_numbers=(((1,), (1,)), ((), ())),
                preferred_element_type=jnp.float32,
            )                                          # (tq, tkv)
            if apply_mask:
                s = jnp.where(visible, s, _NEG_INF)

            m_prev = m_ref[h]                          # (tq, 128) lane-replicated
            l_prev = l_ref[h]
            m_next = jnp.maximum(m_prev, s.max(axis=-1, keepdims=True))
            alpha = jnp.exp(m_prev[:, :1] - m_next[:, :1])       # (tq, 1)
            p = jnp.exp(s - m_next[:, :1])                       # (tq, tkv)

            l_ref[h] = alpha * l_prev + p.sum(axis=-1, keepdims=True)
            m_ref[h] = m_next
            acc_ref[:, hs] = alpha * acc_ref[:, hs] + jnp.dot(
                p.astype(v_h.dtype), v_h, preferred_element_type=jnp.float32
            )

    # Fully-visible KV tiles: skip the iota/compare/select entirely.
    @pl.when(kv_last <= q_first)
    def _full_tiles():
        _process(False)

    # Diagonal (partially visible) KV tiles: apply the causal mask.
    @pl.when(jnp.logical_and(kv_first <= q_last, kv_last > q_first))
    def _diag_tiles():
        _process(True)

    # Fully-masked (future) tiles: no compute at all; the clamped K/V
    # index_map also keeps them from issuing any HBM DMA.

    @pl.when(ki == nk - 1)
    def _finalize():
        for h in range(n_head):
            hs = slice(h * d, (h + 1) * d)
            inv = 1.0 / l_ref[h][:, :1]      # exact reciprocal, once per q tile
            acc_ref[:, hs] = acc_ref[:, hs] * inv
        o_ref[0] = acc_ref[...].astype(o_ref.dtype)   # one lane-dense (tq, C) store


def causal_attention(q, k, v, *, n_head, tq_cap=256, tkv_cap=512):
    """q, k, v: (B, T, C) (heads still interleaved along C) -> (B, T, C)."""
    B, T, C = q.shape
    assert C % n_head == 0

    tq = _pick_tile(T, tq_cap, _sublane_align(q.dtype))
    tkv = _pick_tile(T, tkv_cap, 128 if T >= 128 else 8)
    grid = (B, T // tq, T // tkv)  # kv reduction axis last

    def q_map(b, i, j):
        return (b, i, 0)

    def kv_map(b, i, j):
        # Clamp to the causal boundary: upper-triangle KV tiles map to the
        # already-resident block -> no HBM DMA for causally-skipped steps.
        j_max = (i * tq + tq - 1) // tkv
        return (b, jnp.minimum(j, j_max), 0)

    kernel = functools.partial(_flash_attn_kernel, n_head=n_head)

    return pl.pallas_call(
        kernel,
        out_shape=jax.ShapeDtypeStruct((B, T, C), q.dtype),
        grid_spec=pltpu.PrefetchScalarGridSpec(
            num_scalar_prefetch=0,
            grid=grid,
            in_specs=[
                pl.BlockSpec((1, tq, C), q_map),
                pl.BlockSpec((1, tkv, C), kv_map),
                pl.BlockSpec((1, tkv, C), kv_map),
            ],
            out_specs=pl.BlockSpec((1, tq, C), q_map),
            scratch_shapes=[
                pltpu.VMEM((tq, C), q.dtype),                 # pre-scaled q
                pltpu.VMEM((n_head, tq, 128), jnp.float32),   # running max m
                pltpu.VMEM((n_head, tq, 128), jnp.float32),   # running sum l
                pltpu.VMEM((tq, C), jnp.float32),             # output accumulator
            ],
        ),
        compiler_params=pltpu.CompilerParams(
            dimension_semantics=("parallel", "parallel", "arbitrary"),
            vmem_limit_bytes=_VMEM_LIMIT,
        ),
    )(q, k, v)


# ----------------------------------------------------------------------------
# Full module forward
# ----------------------------------------------------------------------------
def causal_self_attention(x, params, n_head):
    B, T, C = x.shape

    # qkv projection (tiled Pallas matmul, bias fused)
    qkv = linear(x.reshape(B * T, C), params["w_attn"], params["b_attn"])
    qkv = qkv.reshape(B, T, 3 * C)

    # Only contiguous column slices here -- no (B,H,T,D) transposes. The
    # per-head layout is handled inside the attention kernel with static lane
    # slices, and its output is already the lane-dense (B, T, C) layout the
    # output projection needs.
    # TODO(synk): when C % 128 == 0, even these slices can be fused away by
    # pointing three column-block BlockSpecs directly at the (B, T, 3C) buffer.
    q = qkv[:, :, :C]
    k = qkv[:, :, C:2 * C]
    v = qkv[:, :, 2 * C:]

    y = causal_attention(q, k, v, n_head=n_head)          # (B, T, C)

    # output projection (tiled Pallas matmul, bias fused)
    y = linear(y.reshape(B * T, C), params["w_proj"], params["b_proj"])
    return y.reshape(B, T, C)
    # attn_dropout / resid_dropout are identity in eval mode (p = 0).


# ----------------------------------------------------------------------------
# Pure-JAX reference (same math) for sanity check
# ----------------------------------------------------------------------------
def reference(x, params, n_head):
    B, T, C = x.shape
    D = C // n_head
    qkv = x.reshape(B * T, C) @ params["w_attn"] + params["b_attn"]
    q, k, v = jnp.split(qkv.reshape(B, T, 3 * C), 3, axis=2)
    q = q.reshape(B, T, n_head, D).transpose(0, 2, 1, 3)
    k = k.reshape(B, T, n_head, D).transpose(0, 2, 1, 3)
    v = v.reshape(B, T, n_head, D).transpose(0, 2, 1, 3)
    s = jnp.einsum("bhqd,bhkd->bhqk", q, k) / math.sqrt(D)
    mask = jnp.tril(jnp.ones((T, T), dtype=bool))
    s = jnp.where(mask, s, -jnp.inf)
    p = jax.nn.softmax(s, axis=-1)
    y = jnp.einsum("bhqk,bhkd->bhqd", p, v)
    y = y.transpose(0, 2, 1, 3).reshape(B, T, C)
    y = y.reshape(B * T, C) @ params["w_proj"] + params["b_proj"]
    return y.reshape(B, T, C)


if __name__ == "__main__":
    # small config: n_embd=32, n_head=4, batch=2, seq=8, bias=True, dropout=0
    B, T, C, H = 2, 8, 32, 4

    key = jax.random.PRNGKey(0)
    k_x, k_wa, k_ba, k_wp, k_bp = jax.random.split(key, 5)

    x = jax.random.normal(k_x, (B, T, C), dtype=jnp.float32)
    params = {
        "w_attn": jax.random.normal(k_wa, (C, 3 * C), dtype=jnp.float32) * 0.02,
        "b_attn": jax.random.normal(k_ba, (3 * C,), dtype=jnp.float32) * 0.02,
        "w_proj": jax.random.normal(k_wp, (C, C), dtype=jnp.float32) * 0.02,
        "b_proj": jax.random.normal(k_bp, (C,), dtype=jnp.float32) * 0.02,
    }

    y = causal_self_attention(x, params, H)
    jax.block_until_ready(y)

    y_ref = reference(x, params, H)
    assert y.shape == (B, T, C)
    assert jnp.allclose(y, y_ref, atol=1e-3, rtol=1e-3), "mismatch vs reference"

    print("KERNEL_OK")
</pallas_src>

<mosaic_0001>
module attributes {stable_mosaic.version = 11 : i64} {
  func.func @_linear_kernel(%arg0: i32, %arg1: i32, %arg2: i32, %arg3: memref<16x32xf32, #tpu.memory_space<vmem>>, %arg4: memref<32x96xf32, #tpu.memory_space<vmem>>, %arg5: memref<1x96xf32, #tpu.memory_space<vmem>>, %arg6: memref<16x96xf32, #tpu.memory_space<vmem>>, %arg7: memref<16x96xf32, #tpu.memory_space<vmem>>) attributes {dimension_semantics = [#tpu.dimension_semantics<parallel>, #tpu.dimension_semantics<parallel>, #tpu.dimension_semantics<arbitrary>], iteration_bounds = array<i64: 1, 1, 1>, scalar_prefetch = 0 : i64, scratch_operands = 1 : i64, tpu.core_type = #tpu.core_type<tc>, window_params = [{transform_indices = @transform_0, window_bounds = array<i64: 16, 32>}, {transform_indices = @transform_1, window_bounds = array<i64: 32, 96>}, {transform_indices = @transform_2, window_bounds = array<i64: 1, 96>}, {transform_indices = @transform_3, window_bounds = array<i64: 16, 96>}]} {
    %c0_i32 = arith.constant 0 : i32
    %0 = arith.cmpi eq, %arg2, %c0_i32 : i32
    %1 = arith.extui %0 : i1 to i32
    %c0_i32_0 = arith.constant 0 : i32
    %2 = arith.cmpi ne, %1, %c0_i32_0 : i32
    scf.if %2 {
      %cst_10 = arith.constant 0.000000e+00 : f32
      %12 = vector.broadcast %cst_10 : f32 to vector<16x96xf32>
      %c0_11 = arith.constant 0 : index
      %c0_12 = arith.constant 0 : index
      %13 = vector.load %arg7[%c0_11, %c0_12] : memref<16x96xf32, #tpu.memory_space<vmem>>, vector<16x96xf32>
      tpu.vector_store %arg7[%c0_11, %c0_12], %12 {strides = array<i32>} : memref<16x96xf32, #tpu.memory_space<vmem>>, vector<16x96xf32>,
    } else {
    }
    %c0 = arith.constant 0 : index
    %c0_1 = arith.constant 0 : index
    %3 = vector.load %arg7[%c0, %c0_1] : memref<16x96xf32, #tpu.memory_space<vmem>>, vector<16x96xf32>
    %c0_2 = arith.constant 0 : index
    %c0_3 = arith.constant 0 : index
    %4 = vector.load %arg3[%c0_2, %c0_3] : memref<16x32xf32, #tpu.memory_space<vmem>>, vector<16x32xf32>
    %c0_4 = arith.constant 0 : index
    %c0_5 = arith.constant 0 : index
    %5 = vector.load %arg4[%c0_4, %c0_5] : memref<32x96xf32, #tpu.memory_space<vmem>>, vector<32x96xf32>
    %cst = arith.constant dense<0.000000e+00> : vector<16x96xf32>
    %6 = tpu.matmul %4, %5, %cst {dimension_numbers = #tpu.dot_dimension_numbers<[1], [0], [0], [1], [0, 0, 1, 1], [], []>} : vector<16x32xf32>, vector<32x96xf32>, vector<16x96xf32> -> vector<16x96xf32>
    %7 = arith.addf %3, %6 : vector<16x96xf32>
    %c0_6 = arith.constant 0 : index
    %c0_7 = arith.constant 0 : index
    %8 = vector.load %arg7[%c0_6, %c0_7] : memref<16x96xf32, #tpu.memory_space<vmem>>, vector<16x96xf32>
    tpu.vector_store %arg7[%c0_6, %c0_7], %7 {strides = array<i32>} : memref<16x96xf32, #tpu.memory_space<vmem>>, vector<16x96xf32>,
    %c0_i32_8 = arith.constant 0 : i32
    %9 = arith.cmpi eq, %arg2, %c0_i32_8 : i32
    %10 = arith.extui %9 : i1 to i32
    %c0_i32_9 = arith.constant 0 : i32
    %11 = arith.cmpi ne, %10, %c0_i32_9 : i32
    scf.if %11 {
      %c0_10 = arith.constant 0 : index
      %c0_11 = arith.constant 0 : index
      %12 = vector.load %arg7[%c0_10, %c0_11] : memref<16x96xf32, #tpu.memory_space<vmem>>, vector<16x96xf32>
      %c0_12 = arith.constant 0 : index
      %c0_13 = arith.constant 0 : index
      %13 = vector.load %arg5[%c0_12, %c0_13] : memref<1x96xf32, #tpu.memory_space<vmem>>, vector<1x96xf32>
      %14 = vector.broadcast %13 : vector<1x96xf32> to vector<16x96xf32>
      %15 = arith.addf %12, %14 : vector<16x96xf32>
      %c0_14 = arith.constant 0 : index
      %c0_15 = arith.constant 0 : index
      %16 = vector.load %arg6[%c0_14, %c0_15] : memref<16x96xf32, #tpu.memory_space<vmem>>, vector<16x96xf32>
      tpu.vector_store %arg6[%c0_14, %c0_15], %15 {strides = array<i32>} : memref<16x96xf32, #tpu.memory_space<vmem>>, vector<16x96xf32>,
    } else {
    }
    return
  }
  func.func @transform_0(%arg0: i32, %arg1: i32, %arg2: i32) -> (i32, i32) {
    %c0_i32 = arith.constant 0 : i32
    return %arg0, %arg2 : i32, i32
  }
  func.func @transform_1(%arg0: i32, %arg1: i32, %arg2: i32) -> (i32, i32) {
    %c0_i32 = arith.constant 0 : i32
    return %arg2, %arg1 : i32, i32
  }
  func.func @transform_2(%arg0: i32, %arg1: i32, %arg2: i32) -> (i32, i32) {
    %c0_i32 = arith.constant 0 : i32
    %c0_i32_0 = arith.constant 0 : i32
    return %c0_i32, %arg1 : i32, i32
  }
  func.func @transform_3(%arg0: i32, %arg1: i32, %arg2: i32) -> (i32, i32) {
    %c0_i32 = arith.constant 0 : i32
    return %arg0, %arg1 : i32, i32
  }
}

</mosaic_0001>

<llo_original>
// kernel: tpu_custom_call.1
$region0: #{tpu_custom_call.1}
  #allocation0 [shape = 'u32[]', space=smem, size = 0x4, offset = 0x4, fixed_abs, tag = 'smem constant byte address 0x4 - core index']
  #allocation1 [shape = 'u32[144,128]{1,0:T(1,128)}', space=vmem, size = 0x12000, scoped, tag = 'internal scratch']
  #allocation2 [shape = 'f32[16,96]{1,0:T(8,128)}', space=vmem, size = 0x2000, scoped, tag = 'scratch operand']
  %s0 = inlined_call_operand.hbm [shape: f32[16,32], index: 0, kind: input, shape index: {}]
  %s1 = inlined_call_operand.hbm [shape: f32[32,96], index: 1, kind: input, shape index: {}]
  %s2 = inlined_call_operand.hbm [shape: f32[1,96], index: 2, kind: input, shape index: {}]
  %s3 = inlined_call_operand.hbm [shape: f32[16,96], index: 3, kind: output, shape index: {}]
  %s4 = sld [smem:[#allocation0]]
  $region42: #{tpu_custom_call.1} parent=0
    _
  %s6 = ssub.s32 1, %s4
  %s7 = scalar_select 0, %s6, %s4
  $region1: #{tpu_custom_call.1} parent=0
    #allocation3 [shape = 'u8[8192]{0}', space=vmem, size = 0x2000, scoped, tag = 'input window, operand 0, single buffered']
    #allocation4 [shape = 's32[1]{0}', space=sflag, size = 0x4, scoped, tag = 'scoped memory for tpu_custom_call.1']
    #allocation5 [shape = 's32[1]{0}', space=sflag, size = 0x4, scoped, tag = 'scoped memory for tpu_custom_call.1']
    #allocation6 [shape = 'u8[16384]{0}', space=vmem, size = 0x4000, scoped, tag = 'input window, operand 1, single buffered']
    #allocation7 [shape = 's32[1]{0}', space=sflag, size = 0x4, scoped, tag = 'scoped memory for tpu_custom_call.1']
    #allocation8 [shape = 'u8[512]{0}', space=vmem, size = 0x400, scoped, tag = 'input window, operand 2, single buffered']
    #allocation9 [shape = 'u8[8192]{0}', space=vmem, size = 0x2000, scoped, tag = 'output window, operand 0, single buffered']
    %8 = vsyncpa [#allocation4], 0
    %9 = vsyncpa [#allocation7], 0
    %10 = vsyncpa [#allocation5], 0
    // Predicated region
    $region2: #{tpu_custom_call.1} parent=1 // pred_check
      _
    $region3: #{tpu_custom_call.1} parent=1 // pred_check_branch
      %12 = sbr.rel (0) target = $region5
    $region4: #{tpu_custom_call.1} parent=1 // pred_region
      %s14 = ssub.s32 256, 256
      %15 = vsyncadd [#allocation4], %s14
      %s16 = sshll.u32 [#allocation3], 4
      %s17 = int_to_ptr.vmem [resolvable:$true] %s16
      %22 = dma.hbm_to_vmem [thread:$0]  %s0, 256, %s17, [#allocation4], 128, 128, 8
    $region5: #{tpu_custom_call.1} parent=1 // pred_fallthru
      _
    // Predicated region
    $region6: #{tpu_custom_call.1} parent=1 // pred_check
      _
    $region7: #{tpu_custom_call.1} parent=1 // pred_check_branch
      %24 = sbr.rel (0) target = $region9
    $region8: #{tpu_custom_call.1} parent=1 // pred_region
      %s26 = ssub.s32 512, 512
      %27 = vsyncadd [#allocation7], %s26
      %s28 = sshll.u32 [#allocation6], 4
      %s29 = int_to_ptr.vmem [resolvable:$true] %s28
      %34 = dma.hbm_to_vmem [thread:$0]  %s1, 512, %s29, [#allocation7], 128, 128, 8
    $region9: #{tpu_custom_call.1} parent=1 // pred_fallthru
      _
    // Predicated region
    $region10: #{tpu_custom_call.1} parent=1 // pred_check
      _
    $region11: #{tpu_custom_call.1} parent=1 // pred_check_branch
      %36 = sbr.rel (0) target = $region13
    $region12: #{tpu_custom_call.1} parent=1 // pred_region
      %s38 = ssub.s32 16, 16
      %39 = vsyncadd [#allocation7], %s38
      %s41 = sshll.u32 [#allocation8], 4
      %s42 = int_to_ptr.vmem [resolvable:$true] %s41
      %44 = dma.hbm_to_vmem [thread:$0]  %s2, 16, %s42, [#allocation7]
    $region13: #{tpu_custom_call.1} parent=1 // pred_fallthru
      _
    // Predicated region
    $region14: #{tpu_custom_call.1} parent=1 // pred_check
      _
    $region15: #{tpu_custom_call.1} parent=1 // pred_check_branch
      %46 = sbr.rel (0) target = $region17
    $region16: #{tpu_custom_call.1} parent=1 // pred_region
      %47 = dma.done [#allocation4], 256
    $region17: #{tpu_custom_call.1} parent=1 // pred_fallthru
      _
    // Predicated region
    $region18: #{tpu_custom_call.1} parent=1 // pred_check
      _
    $region19: #{tpu_custom_call.1} parent=1 // pred_check_branch
      %49 = sbr.rel (0) target = $region21
    $region20: #{tpu_custom_call.1} parent=1 // pred_region
      %50 = dma.done [#allocation7], 512
    $region21: #{tpu_custom_call.1} parent=1 // pred_fallthru
      _
    // Predicated region
    $region22: #{tpu_custom_call.1} parent=1 // pred_check
      _
    $region23: #{tpu_custom_call.1} parent=1 // pred_check_branch
      %52 = sbr.rel (0) target = $region25
    $region24: #{tpu_custom_call.1} parent=1 // pred_region
      %53 = dma.done [#allocation7], 16
    $region25: #{tpu_custom_call.1} parent=1 // pred_fallthru
      _
    %p54 = scmp.eq.s32.totalorder 0, 0
    // Predicated region
    $region26: #{tpu_custom_call.1} parent=1 // pred_check
      %p55 = pneg %p54
    $region27: #{tpu_custom_call.1} parent=1 // pred_check_branch
      %57 = sbr.rel (%p55) target = $region29
    $region28: #{tpu_custom_call.1} parent=1 // pred_region
      %vm58 = vcmask 785408
      %59 = vst.msk [vmem:[#allocation2] sm:$0xff] %vm58, 0.0
      %60 = vst.msk [vmem:[#allocation2 + $0x8] sm:$0xff] %vm58, 0.0
    $region29: #{tpu_custom_call.1} parent=1 // pred_fallthru
      _
    %v61 = vld [vmem:[#allocation2] sm:$0xff]
    %v62 = vld [vmem:[#allocation2 + $0x8] sm:$0xff]
    %v63 = vld [vmem:[#allocation3] sm:$0xff]
    %v64 = vld [vmem:[#allocation3 + $0x8] sm:$0xff]
    %v65 = vld [vmem:[#allocation6] sm:$0xff]
    %v66 = vld [vmem:[#allocation6 + $0x8] sm:$0xff]
    %v67 = vld [vmem:[#allocation6 + $0x10] sm:$0xff]
    %v68 = vld [vmem:[#allocation6 + $0x18] sm:$0xff]
    %vm69 = vcmask 261120
    %v71 = vsel %vm69, %v63, 0
    %v74 = vsel %vm69, %v64, 0
    %76 = vmatprep.subr.mxu0 0.0
    %77 = vmatpush1.msra.mxu0 %v65
    %78 = vmatprep.subr.mxu0 0.0
    %79 = vmatpush1.msra.mxu0 %v66
    %80 = vmatprep.subr.mxu0 0.0
    %81 = vmatpush1.msra.mxu0 %v67
    %82 = vmatprep.subr.mxu0 0.0
    %83 = vmatpush1.msra.mxu0 %v68
    %84 = vmatprep.subr.mxu0 0.0
    %85 = vmatpush1.msra.mxu0 0.0
    %86 = vmatprep.subr.mxu0 0.0
    %87 = vmatpush1.msra.mxu0 0.0
    %88 = vmatprep.subr.mxu0 0.0
    %89 = vmatpush1.msra.mxu0 0.0
    %90 = vmatprep.subr.mxu0 0.0
    %91 = vmatpush1.msra.mxu0 0.0
    %92 = vmatprep.subr.mxu0 0.0
    %93 = vmatpush1.msra.mxu0 0.0
    %94 = vmatprep.subr.mxu0 0.0
    %95 = vmatpush1.msra.mxu0 0.0
    %96 = vmatprep.subr.mxu0 0.0
    %97 = vmatpush1.msra.mxu0 0.0
    %98 = vmatprep.subr.mxu0 0.0
    %99 = vmatpush1.msra.mxu0 0.0
    %100 = vmatprep.subr.mxu0 0.0
    %101 = vmatpush1.msra.mxu0 0.0
    %102 = vmatprep.subr.mxu0 0.0
    %103 = vmatpush1.msra.mxu0 0.0
    %104 = vmatprep.subr.mxu0 0.0
    %105 = vmatpush1.msra.mxu0 0.0
    %106 = vmatprep.subr.mxu0 0.0
    %107 = vmatpush1.msra.mxu0 0.0
    %108 = vmatprep.subr.mxu0 0.0
    %109 = vmatpush1.msra.mxu0 0.0
    %110 = vmatprep.subr.mxu0 0.0
    %111 = vmatpush1.msra.mxu0 0.0
    %112 = vmatprep.subr.mxu0 0.0
    %113 = vmatpush1.msra.mxu0 0.0
    %114 = vmatprep.subr.mxu0 0.0
    %115 = vmatpush1.msra.mxu0 0.0
    %116 = vmatprep.subr.mxu0 0.0
    %117 = vmatpush1.msra.mxu0 0.0
    %118 = vmatprep.subr.mxu0 0.0
    %119 = vmatpush1.msra.mxu0 0.0
    %120 = vmatprep.subr.mxu0 0.0
    %121 = vmatpush1.msra.mxu0 0.0
    %122 = vmatprep.subr.mxu0 0.0
    %123 = vmatpush1.msra.mxu0 0.0
    %124 = vmatprep.subr.mxu0 0.0
    %125 = vmatpush1.msra.mxu0 0.0
    %126 = vmatprep.subr.mxu0 0.0
    %127 = vmatpush1.msra.mxu0 0.0
    %128 = vmatprep.subr.mxu0 0.0
    %129 = vmatpush1.msra.mxu0 0.0
    %130 = vmatprep.subr.mxu0 0.0
    %131 = vmatpush1.msra.mxu0 0.0
    %132 = vmatprep.subr.mxu0 0.0
    %133 = vmatpush1.msra.mxu0 0.0
    %134 = vmatprep.subr.mxu0 0.0
    %135 = vmatpush1.msra.mxu0 0.0
    %136 = vmatprep.subr.mxu0 0.0
    %137 = vmatpush1.msra.mxu0 0.0
    %138 = vmatprep.subr.mxu0 0.0
    %139 = vmatpush1.msra.mxu0 0.0
    %140 = vmatprep.mubr.f32.mxu0 0.0
    %141 = vmatmul.mubr.f32.gmra.mrb[0].mxu0 %v71
    %v142 = vpop.f32.mrb[0].mxu0
    %v143 = vadd.f32 0.0, %v142
    %v144 = vpop.f32.mrb[0].mxu0
    %145 = vmatprep.mubr.f32.mxu0 0.0
    %146 = vmatmul.mubr.f32.gmra.mrb[0].mxu0 %v74
    %v147 = vpop.f32.mrb[0].mxu0
    %v148 = vadd.f32 0.0, %v147
    %v149 = vpop.f32.mrb[0].mxu0
    %150 = vdwg.mxu0
    %v151 = vadd.f32 %v61, %v143
    %v152 = vadd.f32 %v62, %v148
    %vm153 = vcmask 785408
    %154 = vst.msk [vmem:[#allocation2] sm:$0xff] %vm153, %v151
    %155 = vst.msk [vmem:[#allocation2 + $0x8] sm:$0xff] %vm153, %v152
    // Predicated region
    $region30: #{tpu_custom_call.1} parent=1 // pred_check
      %p156 = pneg %p54
    $region31: #{tpu_custom_call.1} parent=1 // pred_check_branch
      %158 = sbr.rel (%p156) target = $region33
    $region32: #{tpu_custom_call.1} parent=1 // pred_region
      %v159 = vld [vmem:[#allocation2] sm:$0xff]
      %v160 = vld [vmem:[#allocation2 + $0x8] sm:$0xff]
      %v161 = vld [vmem:[#allocation8] sm:$0x1]
      %v163 = vlaneseq
      %v164 = vshrl.u32 %v163, 7
      %v165 = vsub.s32 0, %v164
      %v166 = vrot.slane %v161, %v165
      %v168 = vadd.f32 %v159, %v166
      %v169 = vadd.f32 %v160, %v166
      %170 = vst.msk [vmem:[#allocation9] sm:$0xff] %vm153, %v168
      %171 = vst.msk [vmem:[#allocation9 + $0x8] sm:$0xff] %vm153, %v169
    $region33: #{tpu_custom_call.1} parent=1 // pred_fallthru
      _
    // Predicated region
    $region34: #{tpu_custom_call.1} parent=1 // pred_check
      _
    $region35: #{tpu_custom_call.1} parent=1 // pred_check_branch
      %173 = sbr.rel (0) target = $region37
    $region36: #{tpu_custom_call.1} parent=1 // pred_region
      %s175 = ssub.s32 256, 256
      %176 = vsyncadd [#allocation5], %s175
      %s177 = sshll.u32 [#allocation9], 4
      %s178 = int_to_ptr.vmem [resolvable:$true] %s177
      %183 = dma.vmem_to_hbm [thread:$0]  %s178, 256, %s3, [#allocation5], 128, 128, 8
    $region37: #{tpu_custom_call.1} parent=1 // pred_fallthru
      _
    // Predicated region
    $region38: #{tpu_custom_call.1} parent=1 // pred_check
      _
    $region39: #{tpu_custom_call.1} parent=1 // pred_check_branch
      %185 = sbr.rel (0) target = $region41
    $region40: #{tpu_custom_call.1} parent=1 // pred_region
      %186 = dma.done [#allocation5], 256
    $region41: #{tpu_custom_call.1} parent=1 // pred_fallthru
      _
    %187 = vsyncpa [#allocation4], 1
    %188 = vsyncpa [#allocation7], 1
    %189 = vsyncpa [#allocation5], 1

</llo_original>
